<compile_context>
chip_gen: v6e
topology: v6e:2x2x1
jax: 0.10.0
libtpu: 0.0.40
codegen_flags: <defaults>
</compile_context>

<pallas_src>
import functools
import math

import jax
import jax.numpy as jnp
from jax.experimental import pallas as pl
from jax.experimental.pallas import tpu as pltpu


_NUM_CONSTS = 9  # [a0, b0, A, B, C, D, wv_dir, ox_const, hc_const]


def _transformer_kernel(slab_ref, out_ref, *, B, F, H, Dh, num_layers):
    """slab: (H*B, F + 9); row h*B + b holds x[b, :] in cols [0:F] and the
    per-head scalar constants (duplicated per batch) in cols [F:F+9].
    out: (2*B, F); rows [0:B] = h_ox, rows [B:2B] = h_c."""
    slab = slab_ref[...]
    x = slab[:, :F]                                          # (H*B, F)

    def cst(j):
        return slab[:, F + j:F + j + 1]                      # (H*B, 1)

    alpha, beta = cst(0), cst(1)                             # layer-1 coeffs
    A, Bc, C, D = cst(2), cst(3), cst(4), cst(5)             # layer recurrence
    wv_dir, ox_const, hc_const = cst(6), cst(7), cst(8)      # output coeffs

    inv_sqrt_d = 1.0 / math.sqrt(Dh)

    s = jnp.zeros((H * B, 1), jnp.float32)
    for layer in range(num_layers):                          # static unroll
        if layer > 0:
            alpha = s * A + Bc
            beta = s * C + D
        scores = (alpha * x + beta) * inv_sqrt_d             # (H*B, F)
        m = jnp.max(scores, axis=-1, keepdims=True)          # XLU lane reduce
        p = jnp.exp(scores - m)                              # EUP
        denom = jnp.sum(p, axis=-1, keepdims=True)
        # Exact division: sum(attn) == 1 is required by the rank-1 rewrite.
        s = jnp.sum(p * x, axis=-1, keepdims=True) / denom   # s = attn . x

    sum_x = jnp.sum(x, axis=-1, keepdims=True)               # (H*B, 1)
    ox_terms = s * wv_dir + ox_const                         # (H*B, 1)
    hc_terms = (sum_x - s) * wv_dir + hc_const               # (H*B, 1)

    # Head reduction: rows are head-major (row = h*B + b), so each head's
    # batch block is a contiguous static sublane slice.
    hox = ox_terms[0:B, :]
    hc = hc_terms[0:B, :]
    for h in range(1, H):
        hox = hox + ox_terms[h * B:(h + 1) * B, :]
        hc = hc + hc_terms[h * B:(h + 1) * B, :]

    # h_ox / h_c are constant over sequence positions (constant query row).
    out_ref[...] = jnp.concatenate(
        [jnp.broadcast_to(hox, (B, F)), jnp.broadcast_to(hc, (B, F))], axis=0)


def transformer_forward(x, params, *, num_heads, num_layers, embed_dim):
    B, F = x.shape
    E, H = embed_dim, num_heads
    Dh = E // H

    # ---- Parameter-only precompute (pure JAX glue, independent of x). ----
    w_emb_col = params["w_emb"][:, 0]                        # (E,)
    b_emb = params["b_emb"]                                  # (E,)
    k_dir = params["wk"] @ w_emb_col                         # (E,)
    k_const = params["wk"] @ b_emb + params["bk"]            # (E,)
    v_dir = params["wv"] @ w_emb_col                         # (E,)
    v_const = params["wv"] @ b_emb + params["bv"]            # (E,)
    q_row = params["wq"] @ b_emb + params["bq"]              # (E,) const query
    w_att = params["w_att"][0]                               # (E,)
    b_att = params["b_att"][0]                               # scalar

    def hdot(a, b):                                          # per-head dot
        return jnp.sum(a.reshape(H, Dh) * b.reshape(H, Dh), axis=-1)   # (H,)

    a0 = hdot(q_row, k_dir)
    b0 = hdot(q_row, k_const)
    A = hdot(v_dir, k_dir)
    Bc = hdot(v_const, k_dir)
    C = hdot(v_dir, k_const)
    D = hdot(v_const, k_const)
    wv_dir = hdot(w_att, v_dir)
    wv_const = hdot(w_att, v_const)
    ox_const = wv_const + b_att / H
    hc_const = (F - 1) * wv_const + b_att / H

    consts = jnp.stack([a0, b0, A, Bc, C, D, wv_dir, ox_const, hc_const],
                       axis=-1).astype(jnp.float32)          # (H, 9)
    consts_hb = jnp.repeat(consts, B, axis=0)                # (H*B, 9)
    x_hb = jnp.tile(x.astype(jnp.float32), (H, 1))           # (H*B, F)
    slab = jnp.concatenate([x_hb, consts_hb], axis=1)        # (H*B, F + 9)

    kernel = functools.partial(_transformer_kernel, B=B, F=F, H=H, Dh=Dh,
                               num_layers=num_layers)
    vmem = pl.BlockSpec(memory_space=pltpu.MemorySpace.VMEM)

    out = pl.pallas_call(
        kernel,
        out_shape=jax.ShapeDtypeStruct((2 * B, F), jnp.float32),
        in_specs=[vmem],
        out_specs=vmem,
        compiler_params=pltpu.CompilerParams(
            vmem_limit_bytes=8 * 1024 * 1024),
    )(slab)
    return out[:B], out[B:]


def init_params(key, embed_dim):
    """Deterministic parameter init mirroring nn.Linear shapes."""
    E = embed_dim
    keys = jax.random.split(key, 5)

    def lin(k, out_f, in_f):
        bound = 1.0 / math.sqrt(in_f)
        kw, kb = jax.random.split(k)
        w = jax.random.uniform(kw, (out_f, in_f), jnp.float32, -bound, bound)
        b = jax.random.uniform(kb, (out_f,), jnp.float32, -bound, bound)
        return w, b

    w_att, b_att = lin(keys[0], 1, E)   # attention_linear: Linear(E, 1)
    w_emb, b_emb = lin(keys[1], E, 1)   # embedding_layer:  Linear(1, E)
    wq, bq = lin(keys[2], E, E)
    wk, bk = lin(keys[3], E, E)
    wv, bv = lin(keys[4], E, E)
    return dict(w_att=w_att, b_att=b_att, w_emb=w_emb, b_emb=b_emb,
                wq=wq, bq=bq, wk=wk, bk=bk, wv=wv, bv=bv)


def reference_forward(x, params, num_heads, num_layers, embed_dim):
    """Pure-JAX transcription of the PyTorch forward (for verification)."""
    E, H = embed_dim, num_heads
    Dh = E // H
    B, F = x.shape
    feats = x[..., None]                                     # (B, F, 1)
    Q = jnp.zeros_like(feats)[..., None]                     # (B, F, 1, 1)
    feats = feats @ params["w_emb"].T + params["b_emb"]      # (B, F, E)
    Q = Q @ params["w_emb"].T + params["b_emb"]              # (B, F, 1, E)
    Q = Q @ params["wq"].T + params["bq"]
    K = feats @ params["wk"].T + params["bk"]
    V = feats @ params["wv"].T + params["bv"]
    Q = Q.reshape(B, F, H, Dh).transpose(0, 2, 1, 3)
    K = K.reshape(B, F, H, Dh).transpose(0, 2, 1, 3)
    V = V.reshape(B, F, H, Dh).transpose(0, 2, 1, 3)
    for _ in range(num_layers):
        attn = jax.nn.softmax(Q @ jnp.swapaxes(K, -2, -1) / Dh ** 0.5, axis=-1)
        Q_c = attn @ V
        Q_nc = (1.0 - attn) @ V
        Q = Q_c
    Q_c = Q_c.transpose(0, 2, 1, 3).reshape(B, F, E)
    Q_nc = Q_nc.transpose(0, 2, 1, 3).reshape(B, F, E)
    h_ox = (Q_c @ params["w_att"].T + params["b_att"])[..., 0]
    h_c = (Q_nc @ params["w_att"].T + params["b_att"])[..., 0]
    return h_ox, h_c


if __name__ == "__main__":
    feature_dim = 8     # sequence length after unsqueeze
    num_heads = 2
    num_layers = 2
    embed_dim = 32
    batch = 2

    key = jax.random.PRNGKey(0)
    kx, kp = jax.random.split(key)
    x = jax.random.normal(kx, (batch, feature_dim), jnp.float32)
    params = init_params(kp, embed_dim)

    h_ox, h_c = transformer_forward(
        x, params, num_heads=num_heads, num_layers=num_layers,
        embed_dim=embed_dim)
    jax.block_until_ready((h_ox, h_c))

    ref_ox, ref_c = reference_forward(x, params, num_heads, num_layers,
                                      embed_dim)
    assert h_ox.shape == (batch, feature_dim)
    assert h_c.shape == (batch, feature_dim)
    # Exact softmax division + f32 everywhere: only reassociation error left.
    assert jnp.allclose(h_ox, ref_ox, atol=1e-3, rtol=1e-3)
    assert jnp.allclose(h_c, ref_c, atol=1e-3, rtol=1e-3)
    print("KERNEL_OK")
</pallas_src>

<mosaic_0001>
module attributes {stable_mosaic.version = 11 : i64} {
  func.func @_transformer_kernel(%arg0: memref<4x17xf32, #tpu.memory_space<vmem>>, %arg1: memref<4x8xf32, #tpu.memory_space<vmem>>) attributes {dimension_semantics = [], scalar_prefetch = 0 : i64, scratch_operands = 0 : i64, tpu.core_type = #tpu.core_type<tc>} {
    %c0 = arith.constant 0 : index
    %c0_0 = arith.constant 0 : index
    %0 = vector.load %arg0[%c0, %c0_0] : memref<4x17xf32, #tpu.memory_space<vmem>>, vector<4x17xf32>
    %1 = vector.extract_strided_slice %0 {offsets = [0, 0], sizes = [4, 8], strides = [1, 1]} : vector<4x17xf32> to vector<4x8xf32>
    %2 = vector.extract_strided_slice %0 {offsets = [0, 8], sizes = [4, 1], strides = [1, 1]} : vector<4x17xf32> to vector<4x1xf32>
    %3 = vector.extract_strided_slice %0 {offsets = [0, 9], sizes = [4, 1], strides = [1, 1]} : vector<4x17xf32> to vector<4x1xf32>
    %4 = vector.extract_strided_slice %0 {offsets = [0, 10], sizes = [4, 1], strides = [1, 1]} : vector<4x17xf32> to vector<4x1xf32>
    %5 = vector.extract_strided_slice %0 {offsets = [0, 11], sizes = [4, 1], strides = [1, 1]} : vector<4x17xf32> to vector<4x1xf32>
    %6 = vector.extract_strided_slice %0 {offsets = [0, 12], sizes = [4, 1], strides = [1, 1]} : vector<4x17xf32> to vector<4x1xf32>
    %7 = vector.extract_strided_slice %0 {offsets = [0, 13], sizes = [4, 1], strides = [1, 1]} : vector<4x17xf32> to vector<4x1xf32>
    %8 = vector.extract_strided_slice %0 {offsets = [0, 14], sizes = [4, 1], strides = [1, 1]} : vector<4x17xf32> to vector<4x1xf32>
    %9 = vector.extract_strided_slice %0 {offsets = [0, 15], sizes = [4, 1], strides = [1, 1]} : vector<4x17xf32> to vector<4x1xf32>
    %10 = vector.extract_strided_slice %0 {offsets = [0, 16], sizes = [4, 1], strides = [1, 1]} : vector<4x17xf32> to vector<4x1xf32>
    %11 = vector.broadcast %2 : vector<4x1xf32> to vector<4x8xf32>
    %12 = arith.mulf %11, %1 : vector<4x8xf32>
    %13 = vector.broadcast %3 : vector<4x1xf32> to vector<4x8xf32>
    %14 = arith.addf %12, %13 : vector<4x8xf32>
    %cst = arith.constant 2.500000e-01 : f32
    %15 = vector.broadcast %cst : f32 to vector<4x8xf32>
    %16 = arith.mulf %14, %15 : vector<4x8xf32>
    %cst_1 = arith.constant dense<0xFF800000> : vector<4xf32>
    %17 = vector.multi_reduction <maximumf>, %16, %cst_1 [1] : vector<4x8xf32> to vector<4xf32>
    %18 = vector.shape_cast %17 : vector<4xf32> to vector<4x1xf32>
    %19 = vector.broadcast %18 : vector<4x1xf32> to vector<4x8xf32>
    %20 = arith.subf %16, %19 : vector<4x8xf32>
    %21 = math.exp %20 : vector<4x8xf32>
    %cst_2 = arith.constant dense<0.000000e+00> : vector<4xf32>
    %22 = vector.multi_reduction <add>, %21, %cst_2 [1] : vector<4x8xf32> to vector<4xf32>
    %23 = vector.shape_cast %22 : vector<4xf32> to vector<4x1xf32>
    %24 = arith.mulf %21, %1 : vector<4x8xf32>
    %cst_3 = arith.constant dense<0.000000e+00> : vector<4xf32>
    %25 = vector.multi_reduction <add>, %24, %cst_3 [1] : vector<4x8xf32> to vector<4xf32>
    %26 = vector.shape_cast %25 : vector<4xf32> to vector<4x1xf32>
    %27 = arith.divf %26, %23 : vector<4x1xf32>
    %28 = arith.mulf %27, %4 : vector<4x1xf32>
    %29 = arith.addf %28, %5 : vector<4x1xf32>
    %30 = arith.mulf %27, %6 : vector<4x1xf32>
    %31 = arith.addf %30, %7 : vector<4x1xf32>
    %32 = vector.broadcast %29 : vector<4x1xf32> to vector<4x8xf32>
    %33 = arith.mulf %32, %1 : vector<4x8xf32>
    %34 = vector.broadcast %31 : vector<4x1xf32> to vector<4x8xf32>
    %35 = arith.addf %33, %34 : vector<4x8xf32>
    %cst_4 = arith.constant 2.500000e-01 : f32
    %36 = vector.broadcast %cst_4 : f32 to vector<4x8xf32>
    %37 = arith.mulf %35, %36 : vector<4x8xf32>
    %cst_5 = arith.constant dense<0xFF800000> : vector<4xf32>
    %38 = vector.multi_reduction <maximumf>, %37, %cst_5 [1] : vector<4x8xf32> to vector<4xf32>
    %39 = vector.shape_cast %38 : vector<4xf32> to vector<4x1xf32>
    %40 = vector.broadcast %39 : vector<4x1xf32> to vector<4x8xf32>
    %41 = arith.subf %37, %40 : vector<4x8xf32>
    %42 = math.exp %41 : vector<4x8xf32>
    %cst_6 = arith.constant dense<0.000000e+00> : vector<4xf32>
    %43 = vector.multi_reduction <add>, %42, %cst_6 [1] : vector<4x8xf32> to vector<4xf32>
    %44 = vector.shape_cast %43 : vector<4xf32> to vector<4x1xf32>
    %45 = arith.mulf %42, %1 : vector<4x8xf32>
    %cst_7 = arith.constant dense<0.000000e+00> : vector<4xf32>
    %46 = vector.multi_reduction <add>, %45, %cst_7 [1] : vector<4x8xf32> to vector<4xf32>
    %47 = vector.shape_cast %46 : vector<4xf32> to vector<4x1xf32>
    %48 = arith.divf %47, %44 : vector<4x1xf32>
    %cst_8 = arith.constant dense<0.000000e+00> : vector<4xf32>
    %49 = vector.multi_reduction <add>, %1, %cst_8 [1] : vector<4x8xf32> to vector<4xf32>
    %50 = vector.shape_cast %49 : vector<4xf32> to vector<4x1xf32>
    %51 = arith.mulf %48, %8 : vector<4x1xf32>
    %52 = arith.addf %51, %9 : vector<4x1xf32>
    %53 = arith.subf %50, %48 : vector<4x1xf32>
    %54 = arith.mulf %53, %8 : vector<4x1xf32>
    %55 = arith.addf %54, %10 : vector<4x1xf32>
    %56 = vector.extract_strided_slice %52 {offsets = [0, 0], sizes = [2, 1], strides = [1, 1]} : vector<4x1xf32> to vector<2x1xf32>
    %57 = vector.extract_strided_slice %55 {offsets = [0, 0], sizes = [2, 1], strides = [1, 1]} : vector<4x1xf32> to vector<2x1xf32>
    %58 = vector.extract_strided_slice %52 {offsets = [2, 0], sizes = [2, 1], strides = [1, 1]} : vector<4x1xf32> to vector<2x1xf32>
    %59 = arith.addf %56, %58 : vector<2x1xf32>
    %60 = vector.extract_strided_slice %55 {offsets = [2, 0], sizes = [2, 1], strides = [1, 1]} : vector<4x1xf32> to vector<2x1xf32>
    %61 = arith.addf %57, %60 : vector<2x1xf32>
    %62 = vector.shape_cast %59 : vector<2x1xf32> to vector<2x1xf32>
    %63 = vector.broadcast %62 : vector<2x1xf32> to vector<2x8xf32>
    %64 = vector.shape_cast %61 : vector<2x1xf32> to vector<2x1xf32>
    %65 = vector.broadcast %64 : vector<2x1xf32> to vector<2x8xf32>
    %66 = tpu.concatenate %63, %65 in 0 : vector<2x8xf32>, vector<2x8xf32> -> vector<4x8xf32>
    %c0_9 = arith.constant 0 : index
    %c0_10 = arith.constant 0 : index
    %67 = vector.load %arg1[%c0_9, %c0_10] : memref<4x8xf32, #tpu.memory_space<vmem>>, vector<4x8xf32>
    tpu.vector_store %arg1[%c0_9, %c0_10], %66 {strides = array<i32>} : memref<4x8xf32, #tpu.memory_space<vmem>>, vector<4x8xf32>,
    return
  }
}

</mosaic_0001>

<llo_original>
// kernel: tpu_custom_call.1
$region0: #{tpu_custom_call.1}
  #allocation0 [shape = 'u32[]', space=smem, size = 0x4, offset = 0x4, fixed_abs, tag = 'smem constant byte address 0x4 - core index']
  #allocation1 [shape = 'u32[144,128]{1,0:T(1,128)}', space=vmem, size = 0x12000, scoped, tag = 'internal scratch']
  %s0 = inlined_call_operand.hbm [shape: f32[4,17], index: 0, kind: input, shape index: {}]
  %s1 = inlined_call_operand.hbm [shape: f32[4,8], index: 1, kind: output, shape index: {}]
  %s2 = sld [smem:[#allocation0]]
  $region18: #{tpu_custom_call.1} parent=0
    _
  %s4 = ssub.s32 1, %s2
  %s5 = scalar_select 0, %s4, %s2
  $region1: #{tpu_custom_call.1} parent=0
    #allocation2 [shape = 'u8[2048]{0}', space=vmem, size = 0x800, scoped, tag = 'input window, operand 0, single buffered']
    #allocation3 [shape = 's32[1]{0}', space=sflag, size = 0x4, scoped, tag = 'scoped memory for tpu_custom_call.1']
    #allocation4 [shape = 's32[1]{0}', space=sflag, size = 0x4, scoped, tag = 'scoped memory for tpu_custom_call.1']
    #allocation5 [shape = 'u8[2048]{0}', space=vmem, size = 0x800, scoped, tag = 'output window, operand 0, single buffered']
    %6 = vsyncpa [#allocation3], 0
    %7 = vsyncpa [#allocation4], 0
    // Predicated region
    $region2: #{tpu_custom_call.1} parent=1 // pred_check
      _
    $region3: #{tpu_custom_call.1} parent=1 // pred_check_branch
      %9 = sbr.rel (0) target = $region5
    $region4: #{tpu_custom_call.1} parent=1 // pred_region
      %s11 = ssub.s32 64, 64
      %12 = vsyncadd [#allocation3], %s11
      %s14 = sshll.u32 [#allocation2], 4
      %s15 = int_to_ptr.vmem [resolvable:$true] %s14
      %17 = dma.hbm_to_vmem [thread:$0]  %s0, 64, %s15, [#allocation3]
    $region5: #{tpu_custom_call.1} parent=1 // pred_fallthru
      _
    // Predicated region
    $region6: #{tpu_custom_call.1} parent=1 // pred_check
      _
    $region7: #{tpu_custom_call.1} parent=1 // pred_check_branch
      %19 = sbr.rel (0) target = $region9
    $region8: #{tpu_custom_call.1} parent=1 // pred_region
      %20 = dma.done [#allocation3], 64
    $region9: #{tpu_custom_call.1} parent=1 // pred_fallthru
      _
    %v21 = vld [vmem:[#allocation2] sm:$0xf]
    %23 = vset.pattern.permute.xlu0 8
    %24 = vperm.xlu0 %23, %v21
    %v25 = vpop.permute.xlu0 %24
    %v27 = vmul.f32 %v25, %v21
    %28 = vset.pattern.permute.xlu0 9
    %29 = vperm.xlu0 %28, %v21
    %v30 = vpop.permute.xlu0 %29
    %v32 = vadd.f32 %v27, %v30
    %v33 = vmul.f32 %v32, 0.25
    %vm34 = vcmask 60416
    %v35 = vsel %vm34, %v33, -inf
    %36 = vmax.xlane.f32.xlu0 %v35
    %v37 = vpop.xlane.xlu0 %36
    %v38 = vsub.f32 %v33, %v37
    %v39 = vmul.f32 %v38, 1.442695
    %v40 = vpow.pop %v39
    %v41 = vsel %vm34, %v40, 0.0
    %42 = vadd.xlane.f32.xlu0 %v41
    %v43 = vpop.xlane.xlu0 %42
    %v44 = vmul.f32 %v40, %v21
    %v45 = vsel %vm34, %v44, 0.0
    %46 = vadd.xlane.f32.xlu0 %v45
    %v47 = vpop.xlane.xlu0 %46
    %v48 = vrcp.pop %v43
    %v49 = vmul.f32 %v47, %v48
    %v50 = vmul.f32 %v49, %v21
    %51 = vrot.lane.b32.xlu0 %v21, 127
    %v52 = vpop.permute.xlu0 %51
    %v54 = vadd.f32 %v50, %v52
    %56 = vset.pattern.permute.xlu0 10
    %57 = vperm.xlu0 %56, %v54
    %v58 = vpop.permute.xlu0 %57
    %v60 = vmul.f32 %v58, %v21
    %61 = vset.pattern.permute.xlu0 12
    %62 = vperm.xlu0 %61, %v54
    %v63 = vpop.permute.xlu0 %62
    %v65 = vadd.f32 %v60, %v63
    %v66 = vmul.f32 %v65, 0.25
    %v67 = vsel %vm34, %v66, -inf
    %68 = vmax.xlane.f32.xlu0 %v67
    %v69 = vpop.xlane.xlu0 %68
    %v70 = vsub.f32 %v66, %v69
    %v71 = vmul.f32 %v70, 1.442695
    %v72 = vpow.pop %v71
    %v73 = vsel %vm34, %v72, 0.0
    %74 = vadd.xlane.f32.xlu0 %v73
    %v75 = vpop.xlane.xlu0 %74
    %v76 = vmul.f32 %v72, %v21
    %v77 = vsel %vm34, %v76, 0.0
    %78 = vadd.xlane.f32.xlu0 %v77
    %v79 = vpop.xlane.xlu0 %78
    %v80 = vrcp.pop %v75
    %v81 = vmul.f32 %v79, %v80
    %v82 = vsel %vm34, %v21, 0.0
    %83 = vadd.xlane.f32.xlu0 %v82
    %v84 = vpop.xlane.xlu0 %83
    %v85 = vmul.f32 %v81, %v21
    %v86 = vadd.f32 %v85, %v52
    %v87 = vsub.f32 %v84, %v81
    %v88 = vmul.f32 %v87, %v21
    %89 = vrot.lane.b32.xlu0 %v21, 126
    %v90 = vpop.permute.xlu0 %89
    %v92 = vadd.f32 %v88, %v90
    %v94 = vrot.slane %v86, 2
    %v96 = vadd.f32 %v86, %v94
    %v98 = vrot.slane %v92, 2
    %v100 = vadd.f32 %v92, %v98
    %102 = vset.pattern.permute.xlu0 14
    %103 = vperm.xlu0 %102, %v96
    %v104 = vpop.permute.xlu0 %103
    %107 = vset.pattern.permute.xlu0 14
    %108 = vperm.xlu0 %107, %v100
    %v109 = vpop.permute.xlu0 %108
    %v110 = vrot.slane %v109, 6
    %vm112 = vcmask 1041408
    %v113 = vsel %vm112, %v104, %v110
    %114 = vst.msk [vmem:[#allocation5] sm:$0xf] %vm34, %v113
    // Predicated region
    $region10: #{tpu_custom_call.1} parent=1 // pred_check
      _
    $region11: #{tpu_custom_call.1} parent=1 // pred_check_branch
      %116 = sbr.rel (0) target = $region13
    $region12: #{tpu_custom_call.1} parent=1 // pred_region
      %s118 = ssub.s32 64, 64
      %119 = vsyncadd [#allocation4], %s118
      %s121 = sshll.u32 [#allocation5], 4
      %s122 = int_to_ptr.vmem [resolvable:$true] %s121
      %124 = dma.vmem_to_hbm [thread:$0]  %s122, 64, %s1, [#allocation4]
    $region13: #{tpu_custom_call.1} parent=1 // pred_fallthru
      _
    // Predicated region
    $region14: #{tpu_custom_call.1} parent=1 // pred_check
      _
    $region15: #{tpu_custom_call.1} parent=1 // pred_check_branch
      %126 = sbr.rel (0) target = $region17
    $region16: #{tpu_custom_call.1} parent=1 // pred_region
      %127 = dma.done [#allocation4], 64
    $region17: #{tpu_custom_call.1} parent=1 // pred_fallthru
      _
    %128 = vsyncpa [#allocation3], 1
    %129 = vsyncpa [#allocation4], 1

</llo_original>
